<compile_context>
chip_gen: v6e
topology: v6e:2x2x1
jax: 0.10.0
libtpu: 0.0.40
codegen_flags: <defaults>
</compile_context>

<pallas_src>
import jax
import jax.numpy as jnp
from jax.experimental import pallas as pl
from jax.experimental.pallas import tpu as pltpu

_LANES = 128                  # vreg lane width; last dim of every block
_SUBLANE_PACK = 32            # sublane multiple legal for f32/bf16/fp8 packing
_TARGET_TILE_BYTES = 2 << 20  # ~2 MiB per input tile, dtype-invariant


def _unnormalize_kernel(x_ref, o_ref):
    # (x + 1) / 2 == (x + 1) * 0.5 exactly in binary floating point.
    # Whole-tile VPU elementwise op.
    x = x_ref[...]
    o_ref[...] = (x + jnp.asarray(1, x.dtype)) * jnp.asarray(0.5, x.dtype)


def _round_up(v, m):
    return ((v + m - 1) // m) * m


def unnormalize(x):
    """Pallas TPU implementation of Unnormalize.forward: (x + 1) / 2."""
    if not jnp.issubdtype(x.dtype, jnp.floating):
        raise TypeError("unnormalize expects a floating-point input (as in the PyTorch module)")

    orig_shape = x.shape
    n = x.size
    if n == 0:
        # Empty input: nothing to compute; result is the same empty array.
        return x

    itemsize = jnp.dtype(x.dtype).itemsize
    x_flat = x.reshape(-1)  # free metadata change for a contiguous array

    # Only pad when the element count is not a multiple of the 128-lane width
    # (rare for activation tensors). 128-aligned inputs take the zero-copy path.
    rem = n % _LANES
    padded = rem != 0
    if padded:
        # TODO(synk): a 1D masked-tail BlockSpec could avoid this pad/slice copy
        # for non-128-multiple sizes; kept as a minimal (<128 elem) pad for safety.
        x_flat = jnp.pad(x_flat, (0, _LANES - rem))

    rows = x_flat.size // _LANES
    x2 = x_flat.reshape(rows, _LANES)  # bitcast; lane-dense layout

    total_bytes = rows * _LANES * itemsize
    if total_bytes <= _TARGET_TILE_BYTES:
        # Small input: a single full-array block (full-array dims are always a
        # legal block shape, even when rows is not a multiple of 8/16/32).
        tile_rows = rows
    else:
        # Dtype-invariant ~2 MiB tiles, capped at ~half the rows (rounded up to
        # a 32-sublane multiple) so the parallel grid always has >= 2 blocks
        # and both v7x TensorCores get work. Pallas masks the partial last
        # block produced by the cdiv grid.
        cap_rows = max(
            _SUBLANE_PACK,
            (_TARGET_TILE_BYTES // (_LANES * itemsize)) // _SUBLANE_PACK * _SUBLANE_PACK,
        )
        half_rows = _round_up((rows + 1) // 2, _SUBLANE_PACK)
        tile_rows = min(cap_rows, half_rows)

    grid = (pl.cdiv(rows, tile_rows),)

    out2 = pl.pallas_call(
        _unnormalize_kernel,
        out_shape=jax.ShapeDtypeStruct((rows, _LANES), x.dtype),
        grid=grid,
        in_specs=[pl.BlockSpec((tile_rows, _LANES), lambda i: (i, 0))],
        out_specs=pl.BlockSpec((tile_rows, _LANES), lambda i: (i, 0)),
        compiler_params=pltpu.CompilerParams(
            dimension_semantics=("parallel",),
        ),
        cost_estimate=pl.CostEstimate(
            flops=2 * rows * _LANES,
            transcendentals=0,
            bytes_accessed=2 * rows * _LANES * itemsize,
        ),
    )(x2)

    out_flat = out2.reshape(-1)
    if padded:
        out_flat = out_flat[:n]
    return out_flat.reshape(orig_shape)


if __name__ == "__main__":
    key = jax.random.PRNGKey(0)
    # NCHW input consistent with the module: batch=2, channels=4, 16x16.
    x = jax.random.uniform(key, (2, 4, 16, 16), dtype=jnp.float32,
                           minval=-1.0, maxval=1.0)

    out = jax.block_until_ready(unnormalize(x))

    # Reference check against plain JAX semantics of (input + 1) / 2.
    ref = (x + 1.0) / 2.0
    assert out.shape == x.shape
    assert out.dtype == x.dtype
    assert jnp.allclose(out, ref, atol=1e-6), "mismatch vs reference"

    print("KERNEL_OK")
</pallas_src>

<mosaic_0001>
module attributes {stable_mosaic.version = 11 : i64} {
  func.func @_unnormalize_kernel(%arg0: i32, %arg1: memref<16x128xf32, #tpu.memory_space<vmem>>, %arg2: memref<16x128xf32, #tpu.memory_space<vmem>>) attributes {dimension_semantics = [#tpu.dimension_semantics<parallel>], iteration_bounds = array<i64: 1>, scalar_prefetch = 0 : i64, scratch_operands = 0 : i64, tpu.core_type = #tpu.core_type<tc>, window_params = [{transform_indices = @transform_0, window_bounds = array<i64: 16, 128>}, {transform_indices = @transform_1, window_bounds = array<i64: 16, 128>}]} {
    %c0 = arith.constant 0 : index
    %c0_0 = arith.constant 0 : index
    %0 = vector.load %arg1[%c0, %c0_0] : memref<16x128xf32, #tpu.memory_space<vmem>>, vector<16x128xf32>
    %cst = arith.constant 1.000000e+00 : f32
    %1 = vector.broadcast %cst : f32 to vector<16x128xf32>
    %2 = arith.addf %0, %1 : vector<16x128xf32>
    %cst_1 = arith.constant 5.000000e-01 : f32
    %3 = vector.broadcast %cst_1 : f32 to vector<16x128xf32>
    %4 = arith.mulf %2, %3 : vector<16x128xf32>
    %c0_2 = arith.constant 0 : index
    %c0_3 = arith.constant 0 : index
    %5 = vector.load %arg2[%c0_2, %c0_3] : memref<16x128xf32, #tpu.memory_space<vmem>>, vector<16x128xf32>
    tpu.vector_store %arg2[%c0_2, %c0_3], %4 {strides = array<i32>} : memref<16x128xf32, #tpu.memory_space<vmem>>, vector<16x128xf32>,
    return
  }
  func.func @transform_0(%arg0: i32) -> (i32, i32) {
    %c0_i32 = arith.constant 0 : i32
    %c0_i32_0 = arith.constant 0 : i32
    return %arg0, %c0_i32 : i32, i32
  }
  func.func @transform_1(%arg0: i32) -> (i32, i32) {
    %c0_i32 = arith.constant 0 : i32
    %c0_i32_0 = arith.constant 0 : i32
    return %arg0, %c0_i32 : i32, i32
  }
}

</mosaic_0001>

<llo_original>
// kernel: tpu_custom_call.1
$region0: #{tpu_custom_call.1}
  #allocation0 [shape = 'u32[]', space=smem, size = 0x4, offset = 0x4, fixed_abs, tag = 'smem constant byte address 0x4 - core index']
  #allocation1 [shape = 'u32[144,128]{1,0:T(1,128)}', space=vmem, size = 0x12000, scoped, tag = 'internal scratch']
  %s0 = inlined_call_operand.hbm [shape: f32[16,128], index: 0, kind: input, shape index: {}]
  %s1 = inlined_call_operand.hbm [shape: f32[16,128], index: 1, kind: output, shape index: {}]
  %s2 = sld [smem:[#allocation0]]
  $region18: #{tpu_custom_call.1} parent=0
    _
  %s4 = ssub.s32 1, %s2
  %s5 = scalar_select 0, %s4, %s2
  $region1: #{tpu_custom_call.1} parent=0
    #allocation2 [shape = 'u8[8192]{0}', space=vmem, size = 0x2000, scoped, tag = 'input window, operand 0, single buffered']
    #allocation3 [shape = 's32[1]{0}', space=sflag, size = 0x4, scoped, tag = 'scoped memory for tpu_custom_call.1']
    #allocation4 [shape = 's32[1]{0}', space=sflag, size = 0x4, scoped, tag = 'scoped memory for tpu_custom_call.1']
    #allocation5 [shape = 'u8[8192]{0}', space=vmem, size = 0x2000, scoped, tag = 'output window, operand 0, single buffered']
    %6 = vsyncpa [#allocation3], 0
    %7 = vsyncpa [#allocation4], 0
    // Predicated region
    $region2: #{tpu_custom_call.1} parent=1 // pred_check
      _
    $region3: #{tpu_custom_call.1} parent=1 // pred_check_branch
      %9 = sbr.rel (0) target = $region5
    $region4: #{tpu_custom_call.1} parent=1 // pred_region
      %s11 = ssub.s32 256, 256
      %12 = vsyncadd [#allocation3], %s11
      %s13 = sshll.u32 [#allocation2], 4
      %s14 = int_to_ptr.vmem [resolvable:$true] %s13
      %19 = dma.hbm_to_vmem [thread:$0]  %s0, 256, %s14, [#allocation3], 128, 128, 8
    $region5: #{tpu_custom_call.1} parent=1 // pred_fallthru
      _
    // Predicated region
    $region6: #{tpu_custom_call.1} parent=1 // pred_check
      _
    $region7: #{tpu_custom_call.1} parent=1 // pred_check_branch
      %21 = sbr.rel (0) target = $region9
    $region8: #{tpu_custom_call.1} parent=1 // pred_region
      %22 = dma.done [#allocation3], 256
    $region9: #{tpu_custom_call.1} parent=1 // pred_fallthru
      _
    %v23 = vld [vmem:[#allocation2] sm:$0xff]
    %v24 = vld [vmem:[#allocation2 + $0x8] sm:$0xff]
    %v25 = vadd.f32 %v23, 1.0
    %v26 = vadd.f32 %v24, 1.0
    %v27 = vmul.f32 %v25, 0.5
    %v28 = vmul.f32 %v26, 0.5
    %29 = vst [vmem:[#allocation5] sm:$0xff] %v27
    %30 = vst [vmem:[#allocation5 + $0x8] sm:$0xff] %v28
    // Predicated region
    $region10: #{tpu_custom_call.1} parent=1 // pred_check
      _
    $region11: #{tpu_custom_call.1} parent=1 // pred_check_branch
      %32 = sbr.rel (0) target = $region13
    $region12: #{tpu_custom_call.1} parent=1 // pred_region
      %s34 = ssub.s32 256, 256
      %35 = vsyncadd [#allocation4], %s34
      %s36 = sshll.u32 [#allocation5], 4
      %s37 = int_to_ptr.vmem [resolvable:$true] %s36
      %42 = dma.vmem_to_hbm [thread:$0]  %s37, 256, %s1, [#allocation4], 128, 128, 8
    $region13: #{tpu_custom_call.1} parent=1 // pred_fallthru
      _
    // Predicated region
    $region14: #{tpu_custom_call.1} parent=1 // pred_check
      _
    $region15: #{tpu_custom_call.1} parent=1 // pred_check_branch
      %44 = sbr.rel (0) target = $region17
    $region16: #{tpu_custom_call.1} parent=1 // pred_region
      %45 = dma.done [#allocation4], 256
    $region17: #{tpu_custom_call.1} parent=1 // pred_fallthru
      _
    %46 = vsyncpa [#allocation3], 1
    %47 = vsyncpa [#allocation4], 1

</llo_original>
